<compile_context>
chip_gen: v7x
topology: tpu7x:2x2x1
jax: 0.10.0
libtpu: 0.0.40
codegen_flags: <defaults>
</compile_context>

<pallas_src>
import jax
import jax.numpy as jnp
from jax.experimental import pallas as pl
from jax.experimental.pallas import tpu as pltpu


def _sent_sim_kernel(e1_ref, e2_ref, w1_ref, w2_ref, b_ref, o_ref):
    # (TB, D1) * (1, D1) broadcast-mul on the VPU, lane reduce on the XLU,
    # scalar bias from SMEM, sigmoid on the EUP. No MXU push/pop latency.
    acc = jnp.sum(e1_ref[...] * w1_ref[...], axis=-1, keepdims=True)
    acc = acc + jnp.sum(e2_ref[...] * w2_ref[...], axis=-1, keepdims=True)
    logits = acc + b_ref[0]
    o_ref[...] = jax.nn.sigmoid(logits).astype(o_ref.dtype)


def _pick_tile_rows(batch, feat_total, vmem_budget_bytes=8 << 20):
    """Rows per tile so 2 (double buffer) x TB x feat_total x 4B fits the budget."""
    max_rows = vmem_budget_bytes // (2 * 4 * max(feat_total, 1))
    max_rows = min(max_rows, 2048)        # per-step overhead already well amortized
    if batch <= max_rows:
        return batch                      # whole batch in a single block
    return max(8, (max_rows // 8) * 8)    # sublane-aligned; Pallas masks the last partial tile


def sentence_similarity_forward(emb1, emb2, w, b):
    """sigmoid(concat([emb1, emb2], -1) @ w + b) with the concat fused in-kernel.

    emb1: (B, D1) f32; emb2: (B, D2) f32; w: (D1+D2, 1) f32; b: (1,) f32.
    Returns (B, 1) f32 — identical to torch.sigmoid(nn.Linear(D1+D2, 1)(x)).
    """
    B, D1 = emb1.shape
    _, D2 = emb2.shape
    # Lane-major weight rows, split at the concat boundary; VMEM-resident.
    w_row = w.reshape(1, D1 + D2)
    w1 = w_row[:, :D1]
    w2 = w_row[:, D1:]
    b = b.reshape(1)

    TB = _pick_tile_rows(B, D1 + D2)
    grid = (pl.cdiv(B, TB),)

    return pl.pallas_call(
        _sent_sim_kernel,
        out_shape=jax.ShapeDtypeStruct((B, 1), jnp.float32),
        grid_spec=pltpu.PrefetchScalarGridSpec(
            num_scalar_prefetch=0,
            grid=grid,
            in_specs=[
                pl.BlockSpec((TB, D1), lambda i: (i, 0)),
                pl.BlockSpec((TB, D2), lambda i: (i, 0)),
                pl.BlockSpec((1, D1), lambda i: (0, 0)),
                pl.BlockSpec((1, D2), lambda i: (0, 0)),
                pl.BlockSpec(memory_space=pltpu.MemorySpace.SMEM),
            ],
            out_specs=pl.BlockSpec((TB, 1), lambda i: (i, 0)),
        ),
        compiler_params=pltpu.CompilerParams(
            dimension_semantics=("parallel",),
        ),
    )(emb1, emb2, w1, w2, b)


if __name__ == "__main__":
    key = jax.random.PRNGKey(0)
    k_x1, k_x2, k_w, k_b = jax.random.split(key, 4)

    # Synthetic sentence embeddings: two 32-dim embeddings per pair.
    batch = 8
    emb_dim = 32
    input_size = 2 * emb_dim  # matches emb1.size(1) + emb2.size(1)

    emb1 = jax.random.normal(k_x1, (batch, emb_dim), dtype=jnp.float32)
    emb2 = jax.random.normal(k_x2, (batch, emb_dim), dtype=jnp.float32)

    # nn.Linear(input_size, 1) parameter shapes: weight stored as (D, 1) for x @ w, bias (1,).
    bound = 1.0 / float(input_size) ** 0.5
    w = jax.random.uniform(k_w, (input_size, 1), jnp.float32, -bound, bound)
    b = jax.random.uniform(k_b, (1,), jnp.float32, -bound, bound)

    out = sentence_similarity_forward(emb1, emb2, w, b)
    out = jax.block_until_ready(out)

    # Reference check in plain JAX (explicit concat, like the PyTorch module input).
    x = jnp.concatenate([emb1, emb2], axis=1)
    ref = jax.nn.sigmoid(x @ w + b.reshape(1, 1))
    assert out.shape == (batch, 1)
    assert jnp.allclose(out, ref, atol=1e-5, rtol=1e-5)

    print("KERNEL_OK")
</pallas_src>

<mosaic_0001>
module attributes {stable_mosaic.version = 11 : i64} {
  func.func @_sent_sim_kernel(%arg0: i32, %arg1: memref<8x32xf32, #tpu.memory_space<vmem>>, %arg2: memref<8x32xf32, #tpu.memory_space<vmem>>, %arg3: memref<1x32xf32, #tpu.memory_space<vmem>>, %arg4: memref<1x32xf32, #tpu.memory_space<vmem>>, %arg5: memref<1xf32, #tpu.memory_space<smem>>, %arg6: memref<8x1xf32, #tpu.memory_space<vmem>>) attributes {dimension_semantics = [#tpu.dimension_semantics<parallel>], iteration_bounds = array<i64: 1>, scalar_prefetch = 0 : i64, scratch_operands = 0 : i64, tpu.core_type = #tpu.core_type<tc>, window_params = [{transform_indices = @transform_0, window_bounds = array<i64: 8, 32>}, {transform_indices = @transform_1, window_bounds = array<i64: 8, 32>}, {pipeline_mode = #tpu.pipeline_mode<synchronous>, transform_indices = @transform_2, window_bounds = array<i64: 1, 32>}, {pipeline_mode = #tpu.pipeline_mode<synchronous>, transform_indices = @transform_3, window_bounds = array<i64: 1, 32>}, {transform_indices = @transform_4, window_bounds = array<i64: 1>}, {transform_indices = @transform_5, window_bounds = array<i64: 8, 1>}]} {
    %c0 = arith.constant 0 : index
    %c0_0 = arith.constant 0 : index
    %0 = vector.load %arg1[%c0, %c0_0] : memref<8x32xf32, #tpu.memory_space<vmem>>, vector<8x32xf32>
    %c0_1 = arith.constant 0 : index
    %c0_2 = arith.constant 0 : index
    %1 = vector.load %arg3[%c0_1, %c0_2] : memref<1x32xf32, #tpu.memory_space<vmem>>, vector<1x32xf32>
    %2 = vector.broadcast %1 : vector<1x32xf32> to vector<8x32xf32>
    %3 = arith.mulf %0, %2 : vector<8x32xf32>
    %cst = arith.constant dense<0.000000e+00> : vector<8xf32>
    %4 = vector.multi_reduction <add>, %3, %cst [1] : vector<8x32xf32> to vector<8xf32>
    %5 = vector.shape_cast %4 : vector<8xf32> to vector<8x1xf32>
    %c0_3 = arith.constant 0 : index
    %c0_4 = arith.constant 0 : index
    %6 = vector.load %arg2[%c0_3, %c0_4] : memref<8x32xf32, #tpu.memory_space<vmem>>, vector<8x32xf32>
    %c0_5 = arith.constant 0 : index
    %c0_6 = arith.constant 0 : index
    %7 = vector.load %arg4[%c0_5, %c0_6] : memref<1x32xf32, #tpu.memory_space<vmem>>, vector<1x32xf32>
    %8 = vector.broadcast %7 : vector<1x32xf32> to vector<8x32xf32>
    %9 = arith.mulf %6, %8 : vector<8x32xf32>
    %cst_7 = arith.constant dense<0.000000e+00> : vector<8xf32>
    %10 = vector.multi_reduction <add>, %9, %cst_7 [1] : vector<8x32xf32> to vector<8xf32>
    %11 = vector.shape_cast %10 : vector<8xf32> to vector<8x1xf32>
    %12 = arith.addf %5, %11 : vector<8x1xf32>
    %c0_8 = arith.constant 0 : index
    %13 = memref.load %arg5[%c0_8] : memref<1xf32, #tpu.memory_space<smem>>
    %14 = vector.broadcast %13 : f32 to vector<8x1xf32>
    %15 = arith.addf %12, %14 : vector<8x1xf32>
    %16 = arith.negf %15 : vector<8x1xf32>
    %17 = math.exp %16 : vector<8x1xf32>
    %cst_9 = arith.constant 1.000000e+00 : f32
    %18 = vector.broadcast %cst_9 : f32 to vector<8x1xf32>
    %19 = arith.addf %18, %17 : vector<8x1xf32>
    %20 = arith.divf %18, %19 : vector<8x1xf32>
    %c0_10 = arith.constant 0 : index
    %c0_11 = arith.constant 0 : index
    %21 = vector.load %arg6[%c0_10, %c0_11] : memref<8x1xf32, #tpu.memory_space<vmem>>, vector<8x1xf32>
    tpu.vector_store %arg6[%c0_10, %c0_11], %20 {strides = array<i32>} : memref<8x1xf32, #tpu.memory_space<vmem>>, vector<8x1xf32>,
    return
  }
  func.func @transform_0(%arg0: i32) -> (i32, i32) {
    %c0_i32 = arith.constant 0 : i32
    %c0_i32_0 = arith.constant 0 : i32
    return %arg0, %c0_i32 : i32, i32
  }
  func.func @transform_1(%arg0: i32) -> (i32, i32) {
    %c0_i32 = arith.constant 0 : i32
    %c0_i32_0 = arith.constant 0 : i32
    return %arg0, %c0_i32 : i32, i32
  }
  func.func @transform_2(%arg0: i32) -> (i32, i32) {
    %c0_i32 = arith.constant 0 : i32
    %c0_i32_0 = arith.constant 0 : i32
    %c0_i32_1 = arith.constant 0 : i32
    return %c0_i32, %c0_i32_0 : i32, i32
  }
  func.func @transform_3(%arg0: i32) -> (i32, i32) {
    %c0_i32 = arith.constant 0 : i32
    %c0_i32_0 = arith.constant 0 : i32
    %c0_i32_1 = arith.constant 0 : i32
    return %c0_i32, %c0_i32_0 : i32, i32
  }
  func.func @transform_4(%arg0: i32) -> i32 {
    %c0_i32 = arith.constant 0 : i32
    %c0_i32_0 = arith.constant 0 : i32
    return %c0_i32 : i32
  }
  func.func @transform_5(%arg0: i32) -> (i32, i32) {
    %c0_i32 = arith.constant 0 : i32
    %c0_i32_0 = arith.constant 0 : i32
    return %arg0, %c0_i32 : i32, i32
  }
}

</mosaic_0001>

<llo_original>
// kernel: tpu_custom_call.1
$region0: #{tpu_custom_call.1}
  #allocation0 [shape = 'u32[]', space=smem, size = 0x4, offset = 0x4, fixed_abs, tag = 'smem constant byte address 0x4 - core index']
  #allocation1 [shape = 'u32[144,128]{1,0:T(1,128)}', space=vmem, size = 0x12000, scoped, tag = 'internal scratch']
  #allocation2 [shape = 'f32[1]{0:T(128)S(6)}', space=smem, size = 0x200, scoped, tag = 'scoped memory for tpu_custom_call.1']
  %s0 = inlined_call_operand.hbm [shape: f32[8,32], index: 0, kind: input, shape index: {}]
  %s1 = inlined_call_operand.hbm [shape: f32[8,32], index: 1, kind: input, shape index: {}]
  %s2 = inlined_call_operand.vmem [shape: f32[1,32], index: 2, kind: input, shape index: {}]
  %s3 = inlined_call_operand.vmem [shape: f32[1,32], index: 3, kind: input, shape index: {}]
  %s4 = inlined_call_operand.<no memory space> [shape: f32[1], index: 4, kind: input, shape index: {}]
  %s5 = inlined_call_operand.vmem [shape: f32[8,1], index: 5, kind: output, shape index: {}]
  %s6 = sld [smem:[#allocation0]]
  $region38: #{tpu_custom_call.1} parent=0
    _
  %s8 = ssub.s32 1, %s6
  %s9 = scalar_select 0, %s8, %s6
  %10 = sst [smem:[#allocation2]] %s4
  $region1: #{tpu_custom_call.1} parent=0
    #allocation3 [shape = 'u8[4096]{0}', space=vmem, size = 0x1000, scoped, tag = 'input window, operand 0, single buffered']
    #allocation4 [shape = 's32[1]{0}', space=sflag, size = 0x4, scoped, tag = 'scoped memory for tpu_custom_call.1']
    #allocation5 [shape = 'u8[4096]{0}', space=vmem, size = 0x1000, scoped, tag = 'input window, operand 1, single buffered']
    #allocation6 [shape = 's32[1]{0}', space=sflag, size = 0x4, scoped, tag = 'scoped memory for tpu_custom_call.1']
    %11 = vsyncpa [#allocation4], 0
    %12 = vsyncpa [#allocation6], 0
    // Predicated region
    $region2: #{tpu_custom_call.1} parent=1 // pred_check
      _
    $region3: #{tpu_custom_call.1} parent=1 // pred_check_branch
      %14 = sbr.rel (0) target = $region5
    $region4: #{tpu_custom_call.1} parent=1 // pred_region
      %s16 = ssub.s32 128, 128
      %17 = vsyncadd [#allocation4], %s16
      %s19 = sshll.u32 [#allocation3], 4
      %s20 = int_to_ptr.vmem [resolvable:$true] %s19
      %22 = dma.hbm_to_vmem [thread:$0]  %s0, 128, %s20, [#allocation4]
    $region5: #{tpu_custom_call.1} parent=1 // pred_fallthru
      _
    // Predicated region
    $region6: #{tpu_custom_call.1} parent=1 // pred_check
      _
    $region7: #{tpu_custom_call.1} parent=1 // pred_check_branch
      %24 = sbr.rel (0) target = $region9
    $region8: #{tpu_custom_call.1} parent=1 // pred_region
      %s26 = ssub.s32 128, 128
      %27 = vsyncadd [#allocation6], %s26
      %s29 = sshll.u32 [#allocation5], 4
      %s30 = int_to_ptr.vmem [resolvable:$true] %s29
      %32 = dma.hbm_to_vmem [thread:$0]  %s1, 128, %s30, [#allocation6]
    $region9: #{tpu_custom_call.1} parent=1 // pred_fallthru
      _
    // Predicated region
    $region10: #{tpu_custom_call.1} parent=1 // pred_check
      _
    $region11: #{tpu_custom_call.1} parent=1 // pred_check_branch
      %34 = sbr.rel (0) target = $region13
    $region12: #{tpu_custom_call.1} parent=1 // pred_region
      _
    $region13: #{tpu_custom_call.1} parent=1 // pred_fallthru
      _
    // Predicated region
    $region14: #{tpu_custom_call.1} parent=1 // pred_check
      _
    $region15: #{tpu_custom_call.1} parent=1 // pred_check_branch
      %36 = sbr.rel (0) target = $region17
    $region16: #{tpu_custom_call.1} parent=1 // pred_region
      _
    $region17: #{tpu_custom_call.1} parent=1 // pred_fallthru
      _
    // Predicated region
    $region18: #{tpu_custom_call.1} parent=1 // pred_check
      _
    $region19: #{tpu_custom_call.1} parent=1 // pred_check_branch
      %38 = sbr.rel (0) target = $region21
    $region20: #{tpu_custom_call.1} parent=1 // pred_region
      _
    $region21: #{tpu_custom_call.1} parent=1 // pred_fallthru
      _
    // Predicated region
    $region22: #{tpu_custom_call.1} parent=1 // pred_check
      _
    $region23: #{tpu_custom_call.1} parent=1 // pred_check_branch
      %40 = sbr.rel (0) target = $region25
    $region24: #{tpu_custom_call.1} parent=1 // pred_region
      %41 = dma.done [#allocation4], 128
    $region25: #{tpu_custom_call.1} parent=1 // pred_fallthru
      _
    // Predicated region
    $region26: #{tpu_custom_call.1} parent=1 // pred_check
      _
    $region27: #{tpu_custom_call.1} parent=1 // pred_check_branch
      %43 = sbr.rel (0) target = $region29
    $region28: #{tpu_custom_call.1} parent=1 // pred_region
      %44 = dma.done [#allocation6], 128
    $region29: #{tpu_custom_call.1} parent=1 // pred_fallthru
      _
    %v45 = vld [vmem:[#allocation3] sm:$0xff]
    %v46 = vld [vmem:[%s2] sm:$0x1]
    %v48 = vlaneseq
    %v49 = vshrl.u32 %v48, 7
    %v50 = vsub.s32 0, %v49
    %v51 = vrot.slane %v46, %v50
    %v53 = vmul.f32 %v45, %v51
    %vm54 = vcmask 261120
    %v55 = vsel %vm54, %v53, 0.0
    %56 = vadd.xlane.f32.xlu0 %v55
    %v57 = vpop.xlane.xlu0 %56
    %v58 = vld [vmem:[#allocation5] sm:$0xff]
    %v59 = vld [vmem:[%s3] sm:$0x1]
    %v61 = vlaneseq
    %v62 = vshrl.u32 %v61, 7
    %v63 = vsub.s32 0, %v62
    %v64 = vrot.slane %v59, %v63
    %v66 = vmul.f32 %v58, %v64
    %v67 = vsel %vm54, %v66, 0.0
    %68 = vadd.xlane.f32.xlu0 %v67
    %v69 = vpop.xlane.xlu0 %68
    %v70 = vadd.f32 %v57, %v69
    %s71 = sld [smem:[#allocation2]]
    %v72 = vstv %s71
    %v73 = vadd.f32 %v70, %v72
    %v74 = vxor.u32 %v73, 2147483648
    %v75 = vmul.f32 %v74, 1.442695
    %v76 = vpow.pop %v75
    %v77 = vadd.f32 %v76, 1.0
    %v78 = vrcp.pop %v77
    %v79 = vmul.f32 1.0, %v78
    %vm80 = vcmask 7168
    %81 = vst.msk [vmem:[%s5] sm:$0xff] %vm80, %v79
    // Predicated region
    $region30: #{tpu_custom_call.1} parent=1 // pred_check
      _
    $region31: #{tpu_custom_call.1} parent=1 // pred_check_branch
      %83 = sbr.rel (0) target = $region33
    $region32: #{tpu_custom_call.1} parent=1 // pred_region
      _
    $region33: #{tpu_custom_call.1} parent=1 // pred_fallthru
      _
    // Predicated region
    $region34: #{tpu_custom_call.1} parent=1 // pred_check
      _
    $region35: #{tpu_custom_call.1} parent=1 // pred_check_branch
      %85 = sbr.rel (0) target = $region37
    $region36: #{tpu_custom_call.1} parent=1 // pred_region
      _
    $region37: #{tpu_custom_call.1} parent=1 // pred_fallthru
      _
    %86 = vsyncpa [#allocation4], 1
    %87 = vsyncpa [#allocation6], 1

</llo_original>
